<compile_context>
chip_gen: v5e
topology: v5e:2x2
jax: 0.10.0
libtpu: 0.0.40
codegen_flags: <defaults>
</compile_context>

<pallas_src>
import jax
import jax.numpy as jnp
from jax.experimental import pallas as pl
from jax.experimental.pallas import tpu as pltpu


def predictor_kernel(x_ref, w_pe_ref, w_comb_ref, b_comb_ref, out_ref, acc_ref):
    """One (batch-tile, packed-token-chunk) grid step.

    x_ref      : (TB, TT, 128)   f32   8 patches packed per lane-dense row
    w_pe_ref   : (128, 8*E)      bf16  block-diagonal patch-embed (bias deferred)
    w_comb_ref : (8*E, Cp)       f32   tile_8(w_fc @ w_hd) / T  (mean+fc+head fused)
    b_comb_ref : (1, Cp)         f32   b_pe @ w_fc @ w_hd + b_fc @ w_hd + b_hd
    out_ref    : (TB, Cp)        f32
    acc_ref    : (TB, 8*E)       f32   running sum of packed encoder outputs
    """
    t = pl.program_id(1)

    @pl.when(t == 0)
    def _init():
        acc_ref[...] = jnp.zeros_like(acc_ref)

    tb, tt, row = x_ref.shape
    # cast to bf16 on the VPU just before the MXU dot (no standalone cast pass)
    x2 = x_ref[...].reshape(tb * tt, row).astype(jnp.bfloat16)
    tok = jnp.dot(x2, w_pe_ref[...], preferred_element_type=jnp.float32)  # (TB*TT, 8E)
    # pooling stays *after* the encoder: per-batch sum over this token chunk
    acc_ref[...] += tok.reshape(tb, tt, -1).sum(axis=1)                   # (TB, 8E)

    @pl.when(t == pl.num_programs(1) - 1)
    def _finalize():
        # 1/T and the 8-group sum are folded into w_comb; biases into b_comb
        out_ref[...] = (
            jnp.dot(acc_ref[...], w_comb_ref[...],
                    preferred_element_type=jnp.float32)
            + b_comb_ref[...]
        ).astype(out_ref.dtype)


def _pick_tile(dim, target, align):
    """Largest multiple of `align` <= target that divides dim (or dim itself)."""
    if dim <= target:
        return dim
    t = (target // align) * align
    while t >= align:
        if dim % t == 0:
            return t
        t -= align
    return dim


def predictor_forward(x, params, *, patch_size, batch_tile=None, token_tile=None):
    """x: (B, num_lead, seq_len) float32 -> (B, num_classes) float32."""
    w_pe, b_pe, w_fc, b_fc, w_hd, b_hd = params
    B, L, S = x.shape
    assert S % patch_size == 0
    P = patch_size
    T = L * (S // P)                      # tokens per sample
    E = w_pe.shape[1]
    C = w_hd.shape[1]
    C_pad = max(128, -(-C // 128) * 128)  # lane-dense output

    # --- lane packing: G patches per 128-lane row ---------------------------
    if P <= 128 and 128 % P == 0 and T % (128 // P) == 0:
        G = 128 // P
    else:
        G = 1   # TODO(synk): lane-sparse fallback for irregular patch sizes
    row = G * P
    Tp = T // G                                              # packed tokens
    x_packed = x.reshape(B, Tp, row)                         # pure reshape, stays f32

    # --- wrapper-side fusion (tiny one-off matmuls in plain JAX) ------------
    w_fch = (w_fc @ w_hd).astype(jnp.float32)                # (E, C)
    b_full = b_pe @ w_fch + b_fc @ w_hd + b_hd               # (C,)  deferred b_pe
    w_pe_bd = jnp.kron(jnp.eye(G, dtype=jnp.float32),
                       w_pe.astype(jnp.float32)).astype(jnp.bfloat16)   # (G*P, G*E)
    w_comb = jnp.zeros((G * E, C_pad), jnp.float32).at[:, :C].set(
        jnp.tile(w_fch / T, (G, 1)))
    b_comb = jnp.zeros((1, C_pad), jnp.float32).at[0, :C].set(b_full)

    # --- tiling --------------------------------------------------------------
    # batch: aim for >=2 "parallel" blocks when B allows (v7x dual TensorCore)
    if batch_tile is not None:
        tb = batch_tile
    else:
        tb = _pick_tile(B, min(64, max(8, B // 2)), 8)
    # packed-token axis: ~4 MiB f32 x-block at defaults (tb=64, tt=256)
    tt = token_tile if token_tile is not None else _pick_tile(Tp, 256, 8)
    assert B % tb == 0 and (tb == B or tb % 8 == 0)
    assert Tp % tt == 0 and (tt == Tp or tt % 8 == 0)
    grid = (B // tb, Tp // tt)

    flops = 2 * B * Tp * row * (G * E) + 2 * B * (G * E) * C_pad
    bytes_accessed = int(x_packed.size * 4 + w_pe_bd.size * 2
                         + (w_comb.size + b_comb.size) * 4 + B * C_pad * 4)

    # streamed input; deepen pipeline only when the token axis is long enough
    x_spec = pl.BlockSpec((tb, tt, row), lambda b, t: (b, t, 0))
    if grid[1] >= 3:
        x_spec = pl.BlockSpec((tb, tt, row), lambda b, t: (b, t, 0),
                              pipeline_mode=pl.Buffered(3))

    out = pl.pallas_call(
        predictor_kernel,
        out_shape=jax.ShapeDtypeStruct((B, C_pad), jnp.float32),
        grid=grid,
        in_specs=[
            x_spec,                                              # streamed tokens
            pl.BlockSpec((row, G * E), lambda b, t: (0, 0)),     # resident weights
            pl.BlockSpec((G * E, C_pad), lambda b, t: (0, 0)),
            pl.BlockSpec((1, C_pad), lambda b, t: (0, 0)),
        ],
        out_specs=pl.BlockSpec((tb, C_pad), lambda b, t: (b, 0)),
        scratch_shapes=[pltpu.VMEM((tb, G * E), jnp.float32)],
        compiler_params=pltpu.CompilerParams(
            dimension_semantics=("parallel", "arbitrary"),
            # explicit scoped-VMEM budget with headroom; safe on v7x (64 MiB
            # physical) and well under v5e/v6e's 128 MiB.
            vmem_limit_bytes=48 * 1024 * 1024),
        cost_estimate=pl.CostEstimate(
            flops=flops, transcendentals=0, bytes_accessed=bytes_accessed),
    )(x_packed, w_pe_bd, w_comb, b_comb)
    return out[:, :C]


def init_params(key, patch_size, emb_dim, backbone_out_dim, num_classes):
    ks = jax.random.split(key, 6)
    w_pe = jax.random.normal(ks[0], (patch_size, emb_dim), jnp.float32) * 0.02
    b_pe = jax.random.normal(ks[1], (emb_dim,), jnp.float32) * 0.02
    w_fc = jax.random.normal(ks[2], (emb_dim, backbone_out_dim), jnp.float32) * 0.02
    b_fc = jax.random.normal(ks[3], (backbone_out_dim,), jnp.float32) * 0.02
    w_hd = jax.random.normal(ks[4], (backbone_out_dim, num_classes), jnp.float32) * 0.02
    b_hd = jax.random.normal(ks[5], (num_classes,), jnp.float32) * 0.02
    return (w_pe, b_pe, w_fc, b_fc, w_hd, b_hd)


def reference_forward(x, params, *, patch_size):
    """Pure-JAX f32 reference of the same computation (unfused)."""
    w_pe, b_pe, w_fc, b_fc, w_hd, b_hd = params
    B, L, S = x.shape
    T = L * (S // patch_size)
    tok = x.reshape(B, T, patch_size) @ w_pe + b_pe     # backbone encoder (synthetic)
    h = jnp.mean(tok, axis=1)                           # torch.mean(h, dim=1)
    h = h @ w_fc + b_fc                                 # self.fc
    h = h @ w_hd + b_hd                                 # self.head
    return h


if __name__ == "__main__":
    B, num_lead, seq_len = 2, 4, 512     # T = 128 tokens -> 16 packed rows
    patch_size = 16
    emb_dim = 32
    backbone_out_dim = 32
    num_classes = 5

    key = jax.random.PRNGKey(0)
    kx, kp = jax.random.split(key)
    x = jax.random.normal(kx, (B, num_lead, seq_len), jnp.float32)
    params = init_params(kp, patch_size, emb_dim, backbone_out_dim, num_classes)

    # token_tile=8 -> two packed-token chunks, exercising the accumulator axis
    out = predictor_forward(x, params, patch_size=patch_size, token_tile=8)
    out = jax.block_until_ready(out)

    ref = reference_forward(x, params, patch_size=patch_size)
    assert out.shape == (B, num_classes)
    assert jnp.allclose(out, ref, atol=1e-3, rtol=1e-2), (
        f"max abs err {jnp.max(jnp.abs(out - ref))}")

    print("KERNEL_OK")
</pallas_src>

<mosaic_0001>
module attributes {stable_mosaic.version = 11 : i64} {
  func.func @predictor_kernel(%arg0: i32, %arg1: i32, %arg2: memref<2x8x128xf32, #tpu.memory_space<vmem>>, %arg3: memref<128x256xbf16, #tpu.memory_space<vmem>>, %arg4: memref<256x128xf32, #tpu.memory_space<vmem>>, %arg5: memref<1x128xf32, #tpu.memory_space<vmem>>, %arg6: memref<2x128xf32, #tpu.memory_space<vmem>>, %arg7: memref<2x256xf32, #tpu.memory_space<vmem>>) attributes {dimension_semantics = [#tpu.dimension_semantics<parallel>, #tpu.dimension_semantics<arbitrary>], iteration_bounds = array<i64: 1, 2>, scalar_prefetch = 0 : i64, scratch_operands = 1 : i64, tpu.core_type = #tpu.core_type<tc>, window_params = [{transform_indices = @transform_0, window_bounds = array<i64: 2, 8, 128>}, {pipeline_mode = #tpu.pipeline_mode<synchronous>, transform_indices = @transform_1, window_bounds = array<i64: 128, 256>}, {pipeline_mode = #tpu.pipeline_mode<synchronous>, transform_indices = @transform_2, window_bounds = array<i64: 256, 128>}, {pipeline_mode = #tpu.pipeline_mode<synchronous>, transform_indices = @transform_3, window_bounds = array<i64: 1, 128>}, {transform_indices = @transform_4, window_bounds = array<i64: 2, 128>}]} {
    %c0_i32 = arith.constant 0 : i32
    %0 = arith.cmpi eq, %arg1, %c0_i32 : i32
    %1 = arith.extui %0 : i1 to i32
    %c0_i32_0 = arith.constant 0 : i32
    %2 = arith.cmpi ne, %1, %c0_i32_0 : i32
    scf.if %2 {
      %cst_11 = arith.constant 0.000000e+00 : f32
      %16 = vector.broadcast %cst_11 : f32 to vector<2x256xf32>
      %c0_12 = arith.constant 0 : index
      %c0_13 = arith.constant 0 : index
      %17 = vector.load %arg7[%c0_12, %c0_13] : memref<2x256xf32, #tpu.memory_space<vmem>>, vector<2x256xf32>
      tpu.vector_store %arg7[%c0_12, %c0_13], %16 {strides = array<i32>} : memref<2x256xf32, #tpu.memory_space<vmem>>, vector<2x256xf32>,
    } else {
    }
    %c0 = arith.constant 0 : index
    %c0_1 = arith.constant 0 : index
    %c0_2 = arith.constant 0 : index
    %3 = vector.load %arg2[%c0, %c0_1, %c0_2] : memref<2x8x128xf32, #tpu.memory_space<vmem>>, vector<2x8x128xf32>
    %4 = vector.shape_cast %3 : vector<2x8x128xf32> to vector<16x128xf32>
    %5 = arith.truncf %4 : vector<16x128xf32> to vector<16x128xbf16>
    %c0_3 = arith.constant 0 : index
    %c0_4 = arith.constant 0 : index
    %6 = vector.load %arg3[%c0_3, %c0_4] : memref<128x256xbf16, #tpu.memory_space<vmem>>, vector<128x256xbf16>
    %cst = arith.constant dense<0.000000e+00> : vector<16x256xf32>
    %7 = tpu.matmul %5, %6, %cst {dimension_numbers = #tpu.dot_dimension_numbers<[1], [0], [0], [1], [0, 0, 1, 1], [], []>} : vector<16x128xbf16>, vector<128x256xbf16>, vector<16x256xf32> -> vector<16x256xf32>
    %c0_5 = arith.constant 0 : index
    %c0_6 = arith.constant 0 : index
    %8 = vector.load %arg7[%c0_5, %c0_6] : memref<2x256xf32, #tpu.memory_space<vmem>>, vector<2x256xf32>
    %9 = vector.shape_cast %7 : vector<16x256xf32> to vector<2x8x256xf32>
    %cst_7 = arith.constant dense<0.000000e+00> : vector<2x256xf32>
    %10 = vector.multi_reduction <add>, %9, %cst_7 [1] : vector<2x8x256xf32> to vector<2x256xf32>
    %11 = arith.addf %8, %10 : vector<2x256xf32>
    %c0_8 = arith.constant 0 : index
    %c0_9 = arith.constant 0 : index
    %12 = vector.load %arg7[%c0_8, %c0_9] : memref<2x256xf32, #tpu.memory_space<vmem>>, vector<2x256xf32>
    tpu.vector_store %arg7[%c0_8, %c0_9], %11 {strides = array<i32>} : memref<2x256xf32, #tpu.memory_space<vmem>>, vector<2x256xf32>,
    %c1_i32 = arith.constant 1 : i32
    %13 = arith.cmpi eq, %arg1, %c1_i32 : i32
    %14 = arith.extui %13 : i1 to i32
    %c0_i32_10 = arith.constant 0 : i32
    %15 = arith.cmpi ne, %14, %c0_i32_10 : i32
    scf.if %15 {
      %c0_11 = arith.constant 0 : index
      %c0_12 = arith.constant 0 : index
      %16 = vector.load %arg7[%c0_11, %c0_12] : memref<2x256xf32, #tpu.memory_space<vmem>>, vector<2x256xf32>
      %c0_13 = arith.constant 0 : index
      %c0_14 = arith.constant 0 : index
      %17 = vector.load %arg4[%c0_13, %c0_14] : memref<256x128xf32, #tpu.memory_space<vmem>>, vector<256x128xf32>
      %cst_15 = arith.constant dense<0.000000e+00> : vector<2x128xf32>
      %18 = tpu.matmul %16, %17, %cst_15 {dimension_numbers = #tpu.dot_dimension_numbers<[1], [0], [0], [1], [0, 0, 1, 1], [], []>} : vector<2x256xf32>, vector<256x128xf32>, vector<2x128xf32> -> vector<2x128xf32>
      %c0_16 = arith.constant 0 : index
      %c0_17 = arith.constant 0 : index
      %19 = vector.load %arg5[%c0_16, %c0_17] : memref<1x128xf32, #tpu.memory_space<vmem>>, vector<1x128xf32>
      %20 = vector.broadcast %19 : vector<1x128xf32> to vector<2x128xf32>
      %21 = arith.addf %18, %20 : vector<2x128xf32>
      %c0_18 = arith.constant 0 : index
      %c0_19 = arith.constant 0 : index
      %22 = vector.load %arg6[%c0_18, %c0_19] : memref<2x128xf32, #tpu.memory_space<vmem>>, vector<2x128xf32>
      tpu.vector_store %arg6[%c0_18, %c0_19], %21 {strides = array<i32>} : memref<2x128xf32, #tpu.memory_space<vmem>>, vector<2x128xf32>,
    } else {
    }
    return
  }
  func.func @transform_0(%arg0: i32, %arg1: i32) -> (i32, i32, i32) {
    %c0_i32 = arith.constant 0 : i32
    %c0_i32_0 = arith.constant 0 : i32
    return %arg0, %arg1, %c0_i32 : i32, i32, i32
  }
  func.func @transform_1(%arg0: i32, %arg1: i32) -> (i32, i32) {
    %c0_i32 = arith.constant 0 : i32
    %c0_i32_0 = arith.constant 0 : i32
    %c0_i32_1 = arith.constant 0 : i32
    return %c0_i32, %c0_i32_0 : i32, i32
  }
  func.func @transform_2(%arg0: i32, %arg1: i32) -> (i32, i32) {
    %c0_i32 = arith.constant 0 : i32
    %c0_i32_0 = arith.constant 0 : i32
    %c0_i32_1 = arith.constant 0 : i32
    return %c0_i32, %c0_i32_0 : i32, i32
  }
  func.func @transform_3(%arg0: i32, %arg1: i32) -> (i32, i32) {
    %c0_i32 = arith.constant 0 : i32
    %c0_i32_0 = arith.constant 0 : i32
    %c0_i32_1 = arith.constant 0 : i32
    return %c0_i32, %c0_i32_0 : i32, i32
  }
  func.func @transform_4(%arg0: i32, %arg1: i32) -> (i32, i32) {
    %c0_i32 = arith.constant 0 : i32
    %c0_i32_0 = arith.constant 0 : i32
    return %arg0, %c0_i32 : i32, i32
  }
}

</mosaic_0001>

<llo_original>
// kernel: tpu_custom_call.1
$region0: #{tpu_custom_call.1}
  #allocation0 [shape = 'u32[]', space=smem, size = 0x4, offset = 0x4, fixed_abs, tag = 'smem constant byte address 0x4 - core index']
  #allocation1 [shape = 'u32[72,128]{1,0:T(1,128)}', space=vmem, size = 0x9000, scoped, tag = 'internal scratch']
  #allocation2 [shape = 'f32[2,256]{1,0:T(2,128)}', space=vmem, size = 0x800, scoped, tag = 'scratch operand']
  %s0 = inlined_call_operand.hbm [shape: f32[2,16,128], index: 0, kind: input, shape index: {}]
  %s1 = inlined_call_operand.hbm [shape: bf16[128,256], index: 1, kind: input, shape index: {}]
  %s2 = inlined_call_operand.hbm [shape: f32[256,128], index: 2, kind: input, shape index: {}]
  %s3 = inlined_call_operand.vmem [shape: f32[1,128], index: 3, kind: input, shape index: {}]
  %s4 = inlined_call_operand.hbm [shape: f32[2,128], index: 4, kind: output, shape index: {}]
  %s5 = sld [smem:[#allocation0]]
  $region69: #{tpu_custom_call.1} parent=0
    _
  %s7 = ssub.s32 1, %s5
  %s8 = scalar_select 0, %s7, %s5
  $region1: #{tpu_custom_call.1} parent=0
    #allocation3 [shape = 'u8[16384]{0}', space=vmem, size = 0x4000, scoped, tag = 'input window, operand 0']
    #allocation4 [shape = 's32[2]{0}', space=sflag, size = 0x8, scoped, tag = 'scoped memory for tpu_custom_call.1']
    #allocation5 [shape = 's32[2]{0}', space=sflag, size = 0x8, scoped, tag = 'scoped memory for tpu_custom_call.1']
    #allocation6 [shape = 'u8[65536]{0}', space=vmem, size = 0x10000, scoped, tag = 'input window, operand 1, single buffered']
    #allocation7 [shape = 's32[1]{0}', space=sflag, size = 0x4, scoped, tag = 'scoped memory for tpu_custom_call.1']
    #allocation8 [shape = 'u8[131072]{0}', space=vmem, size = 0x20000, scoped, tag = 'input window, operand 2, single buffered']
    #allocation9 [shape = 'u8[1024]{0}', space=vmem, size = 0x400, scoped, tag = 'output window, operand 0, single buffered']
    %9 = vsyncpa [#allocation4], 0
    %s10 = scalar_lea.sflag [#allocation4], 1
    %11 = vsyncpa %s10, 0
    %12 = vsyncpa [#allocation7], 0
    %13 = vsyncpa [#allocation5], 0
    loop: start=0, step=1, limit=4
    $region2: #{tpu_custom_call.1} parent=1 // loop_pre_header
      _
    $region3: #{tpu_custom_call.1} parent=1 // loop_header
      %s15 = sphi 0, %s19
      %p16 = scmp.ge.s32.totalorder %s15, 4
      %s22 = sphi 0, %s34
      %s23 = sphi 0, %s30
      %s24 = sphi 0, %s22
      %s25 = sphi 0, %s23
      %s26 = sphi 0, %s24
      %s27 = sphi 0, %s25
      %s39 = sphi 0, %s41
      %s42 = sphi 0, %s39
      %s43 = sphi 0, %s42
      %s59 = sphi 0, %s43
      %s63 = sphi 0, %s63
      %s65 = sphi 0, %s63
      %s66 = sphi 0, %s65
      %s80 = sphi 0, %s66
      %s84 = sphi 0, %s84
      %s86 = sphi 0, %s84
      %s87 = sphi 0, %s86
      %s101 = sphi 0, %s87
      %s105 = sphi 0, %s105
      %s107 = sphi 0, %s105
      %s108 = sphi 0, %s107
      %s122 = sphi 0, %s108
      %s128 = sphi 0, %s130
      %s131 = sphi 0, %s128
      %s132 = sphi 0, %s131
      %s148 = sphi 0, %s132
    $region4: #{tpu_custom_call.1} parent=1 // loop_header_branch
      %18 = sbr.rel (%p16) target = $region8
    $region5: #{tpu_custom_call.1} parent=1 // loop_body
      %s20 = ssub.s32 %s15, 1
      %s21 = ssub.s32 %s15, 2
      %s28 = sadd.s32 1, %s23
      %p29 = scmp.ge.s32.totalorder %s28, 2
      %s30 = scalar_select %p29, 0, %s28
      %s31 = sadd.s32 1, %s22
      %s32 = scalar_select %p29, %s31, %s22
      %p33 = scmp.ge.s32.totalorder %s32, 1
      %s34 = scalar_select %p33, 0, %s32
      %s35 = ssub.s32 %s22, %s34
      %s36 = ssub.s32 %s23, %s30
      %s37 = sor.u32 %s35, %s36
      %p38 = scmp.eq.s32.totalorder %s37, 0
      %s40 = sadd.s32 %s39, 1
      %s41 = scalar_select %p38, %s39, %s40
      %p44 = pneg %p38
      %p45 = scmp.eq.s32.totalorder %s15, 1
      %p46 = por %p44, %p45
      %p47 = scmp.ne.s32.totalorder %s39, %s42
      %p48 = scmp.eq.s32.totalorder %s15, 0
      %p49 = por %p47, %p48
      %p50 = scmp.ne.s32.totalorder %s39, %s42
      %p51 = scmp.eq.s32.totalorder %s20, 1
      %p52 = por %p50, %p51
      %p53 = scmp.ne.s32.totalorder %s42, %s43
      %p54 = scmp.eq.s32.totalorder %s20, 0
      %p55 = por %p53, %p54
      %p56 = scmp.ne.s32.totalorder %s42, %s43
      %p57 = scmp.eq.s32.totalorder %s21, 1
      %p58 = por %p56, %p57
      %p60 = scmp.ne.s32.totalorder %s43, %s59
      %p61 = scmp.eq.s32.totalorder %s21, 0
      %p62 = por %p60, %p61
      %s64 = sadd.s32 %s63, 1
      %p67 = scmp.eq.s32.totalorder %s15, 1
      %p68 = scmp.ne.s32.totalorder %s63, %s65
      %p69 = scmp.eq.s32.totalorder %s15, 0
      %p70 = por %p68, %p69
      %p71 = scmp.ne.s32.totalorder %s63, %s65
      %p72 = scmp.eq.s32.totalorder %s20, 1
      %p73 = por %p71, %p72
      %p74 = scmp.ne.s32.totalorder %s65, %s66
      %p75 = scmp.eq.s32.totalorder %s20, 0
      %p76 = por %p74, %p75
      %p77 = scmp.ne.s32.totalorder %s65, %s66
      %p78 = scmp.eq.s32.totalorder %s21, 1
      %p79 = por %p77, %p78
      %p81 = scmp.ne.s32.totalorder %s66, %s80
      %p82 = scmp.eq.s32.totalorder %s21, 0
      %p83 = por %p81, %p82
      %s85 = sadd.s32 %s84, 1
      %p88 = scmp.eq.s32.totalorder %s15, 1
      %p89 = scmp.ne.s32.totalorder %s84, %s86
      %p90 = scmp.eq.s32.totalorder %s15, 0
      %p91 = por %p89, %p90
      %p92 = scmp.ne.s32.totalorder %s84, %s86
      %p93 = scmp.eq.s32.totalorder %s20, 1
      %p94 = por %p92, %p93
      %p95 = scmp.ne.s32.totalorder %s86, %s87
      %p96 = scmp.eq.s32.totalorder %s20, 0
      %p97 = por %p95, %p96
      %p98 = scmp.ne.s32.totalorder %s86, %s87
      %p99 = scmp.eq.s32.totalorder %s21, 1
      %p100 = por %p98, %p99
      %p102 = scmp.ne.s32.totalorder %s87, %s101
      %p103 = scmp.eq.s32.totalorder %s21, 0
      %p104 = por %p102, %p103
      %s106 = sadd.s32 %s105, 1
      %p109 = scmp.eq.s32.totalorder %s15, 1
      %p110 = scmp.ne.s32.totalorder %s105, %s107
      %p111 = scmp.eq.s32.totalorder %s15, 0
      %p112 = por %p110, %p111
      %p113 = scmp.ne.s32.totalorder %s105, %s107
      %p114 = scmp.eq.s32.totalorder %s20, 1
      %p115 = por %p113, %p114
      %p116 = scmp.ne.s32.totalorder %s107, %s108
      %p117 = scmp.eq.s32.totalorder %s20, 0
      %p118 = por %p116, %p117
      %p119 = scmp.ne.s32.totalorder %s107, %s108
      %p120 = scmp.eq.s32.totalorder %s21, 1
      %p121 = por %p119, %p120
      %p123 = scmp.ne.s32.totalorder %s108, %s122
      %p124 = scmp.eq.s32.totalorder %s21, 0
      %p125 = por %p123, %p124
      %s126 = ssub.s32 %s22, %s34
      %p127 = scmp.eq.s32.totalorder %s126, 0
      %s129 = sadd.s32 %s128, 1
      %s130 = scalar_select %p127, %s128, %s129
      %p133 = pneg %p127
      %p134 = scmp.eq.s32.totalorder %s15, 1
      %p135 = por %p133, %p134
      %p136 = scmp.ne.s32.totalorder %s128, %s131
      %p137 = scmp.eq.s32.totalorder %s15, 0
      %p138 = por %p136, %p137
      %p139 = scmp.ne.s32.totalorder %s128, %s131
      %p140 = scmp.eq.s32.totalorder %s20, 1
      %p141 = por %p139, %p140
      %p142 = scmp.ne.s32.totalorder %s131, %s132
      %p143 = scmp.eq.s32.totalorder %s20, 0
      %p144 = por %p142, %p143
      %p145 = scmp.ne.s32.totalorder %s131, %s132
      %p146 = scmp.eq.s32.totalorder %s21, 1
      %p147 = por %p145, %p146
      %p149 = scmp.ne.s32.totalorder %s132, %s148
      %p150 = scmp.eq.s32.totalorder %s21, 0
      %p151 = por %p149, %p150
      %p152 = scmp.le.s32.totalorder 1, %s15
      %p153 = scmp.lt.s32.totalorder %s15, 3
      %p154 = pnand %p152, %p153
      %p155 = pneg %p154
      // Predicated region
      $region9: #{tpu_custom_call.1} parent=5 // pred_check
        _
      $region10: #{tpu_custom_call.1} parent=5 // pred_check_branch
        %157 = sbr.rel (%p154) target = $region12
      $region11: #{tpu_custom_call.1} parent=5 // pred_region
        %s158 = ssub.s32 %s15, 1
        // Predicated region
        $region13: #{tpu_custom_call.1} parent=11 // pred_check
          %p159 = pneg %p76
        $region14: #{tpu_custom_call.1} parent=11 // pred_check_branch
          %161 = sbr.rel (%p159) target = $region16
        $region15: #{tpu_custom_call.1} parent=11 // pred_region
          %163 = vsyncadd [#allocation7], 0
          %s164 = sshll.u32 %s1, 4
          %s165 = int_to_ptr.hbm [resolvable:$true] %s164
          %s166 = sshll.u32 [#allocation6], 4
          %s167 = int_to_ptr.vmem [resolvable:$true] %s166
          %172 = dma.hbm_to_vmem [thread:$0]  %s165, 2048, %s167, [#allocation7], 128, 128, 8
        $region16: #{tpu_custom_call.1} parent=11 // pred_fallthru
          _
        // Predicated region
        $region17: #{tpu_custom_call.1} parent=11 // pred_check
          %p173 = pneg %p97
        $region18: #{tpu_custom_call.1} parent=11 // pred_check_branch
          %175 = sbr.rel (%p173) target = $region20
        $region19: #{tpu_custom_call.1} parent=11 // pred_region
          %177 = vsyncadd [#allocation7], 0
          %s178 = sshll.u32 %s2, 4
          %s179 = int_to_ptr.hbm [resolvable:$true] %s178
          %s180 = sshll.u32 [#allocation8], 4
          %s181 = int_to_ptr.vmem [resolvable:$true] %s180
          %186 = dma.hbm_to_vmem [thread:$0]  %s179, 4096, %s181, [#allocation7], 128, 128, 8
        $region20: #{tpu_custom_call.1} parent=11 // pred_fallthru
          _
        // Predicated region
        $region21: #{tpu_custom_call.1} parent=11 // pred_check
          %p187 = pneg %p118
        $region22: #{tpu_custom_call.1} parent=11 // pred_check_branch
          %189 = sbr.rel (%p187) target = $region24
        $region23: #{tpu_custom_call.1} parent=11 // pred_region
          _
        $region24: #{tpu_custom_call.1} parent=11 // pred_fallthru
          _
      $region12: #{tpu_custom_call.1} parent=5 // pred_fallthru
        _
      %p190 = scmp.lt.s32.totalorder %s15, 2
      // Predicated region
      $region25: #{tpu_custom_call.1} parent=5 // pred_check
        %p191 = pneg %p190
      $region26: #{tpu_custom_call.1} parent=5 // pred_check_branch
        %193 = sbr.rel (%p191) target = $region28
      $region27: #{tpu_custom_call.1} parent=5 // pred_region
        // Predicated region
        $region29: #{tpu_custom_call.1} parent=27 // pred_check
          %p194 = pneg %p49
        $region30: #{tpu_custom_call.1} parent=27 // pred_check_branch
          %196 = sbr.rel (%p194) target = $region32
        $region31: #{tpu_custom_call.1} parent=27 // pred_region
          %s197 = sand.u32 %s39, 1
          %s198 = scalar_lea.sflag [#allocation4], %s197
          %s199 = sand.u32 %s39, 1
          %s200 = smul.addr %s199, 16
          %s201 = scalar_lea.vmem [#allocation3], %s200
          %s202 = smul.u32 2, %s22
          %204 = vsyncadd %s198, 0
          %s205 = smul.addr %s202, 2
          %s206 = sadd.s32 %s23, %s205
          %s207 = smul.addr %s206, 8
          %s208 = scalar_lea.hbm %s0, %s207
          %s209 = sshll.u32 %s208, 4
          %s210 = int_to_ptr.hbm [resolvable:$true] %s209
          %s211 = sshll.u32 %s201, 4
          %s212 = int_to_ptr.vmem [resolvable:$true] %s211
          %217 = dma.hbm_to_vmem [thread:$0]  %s210, 256, %s212, %s198, 256, 128, 8
        $region32: #{tpu_custom_call.1} parent=27 // pred_fallthru
          _
      $region28: #{tpu_custom_call.1} parent=5 // pred_fallthru
        _
      %p218 = scmp.le.s32.totalorder 1, %s15
      %p219 = scmp.lt.s32.totalorder %s15, 3
      %p220 = pnand %p218, %p219
      %p221 = pneg %p220
      // Predicated region
      $region33: #{tpu_custom_call.1} parent=5 // pred_check
        _
      $region34: #{tpu_custom_call.1} parent=5 // pred_check_branch
        %223 = sbr.rel (%p220) target = $region36
      $region35: #{tpu_custom_call.1} parent=5 // pred_region
        %s224 = ssub.s32 %s15, 1
        %s225 = sand.u32 %s42, 1
        %s226 = scalar_lea.sflag [#allocation4], %s225
        %s227 = sand.u32 %s42, 1
        %s228 = smul.addr %s227, 16
        %s229 = scalar_lea.vmem [#allocation3], %s228
        // Predicated region
        $region37: #{tpu_custom_call.1} parent=35 // pred_check
          %p230 = pneg %p55
        $region38: #{tpu_custom_call.1} parent=35 // pred_check_branch
          %232 = sbr.rel (%p230) target = $region40
        $region39: #{tpu_custom_call.1} parent=35 // pred_region
          %234 = dma.done %s226, 256
        $region40: #{tpu_custom_call.1} parent=35 // pred_fallthru
          _
        // Predicated region
        $region41: #{tpu_custom_call.1} parent=35 // pred_check
          %p235 = pneg %p76
        $region42: #{tpu_custom_call.1} parent=35 // pred_check_branch
          %237 = sbr.rel (%p235) target = $region44
        $region43: #{tpu_custom_call.1} parent=35 // pred_region
          %239 = dma.done [#allocation7], 2048
        $region44: #{tpu_custom_call.1} parent=35 // pred_fallthru
          _
        // Predicated region
        $region45: #{tpu_custom_call.1} parent=35 // pred_check
          %p240 = pneg %p97
        $region46: #{tpu_custom_call.1} parent=35 // pred_check_branch
          %242 = sbr.rel (%p240) target = $region48
        $region47: #{tpu_custom_call.1} parent=35 // pred_region
          %244 = dma.done [#allocation7], 4096
        $region48: #{tpu_custom_call.1} parent=35 // pred_fallthru
          _
        %s245 = sand.u32 %s42, 1
        %s246 = scalar_lea.sflag [#allocation4], %s245
        %s247 = sand.u32 %s42, 1
        %s248 = smul.addr %s247, 16
        %s249 = scalar_lea.vmem [#allocation3], %s248
        %p250 = pneg %p55
        %p251 = pneg %p52
        %p252 = pneg %p76
        %p253 = pneg %p73
        %p254 = pneg %p97
        %p255 = pneg %p94
        %p256 = pneg %p118
        %p257 = pneg %p115
        %p258 = pneg %p144
        %p259 = pneg %p141
        %s260 = smul.u32 2, %s24
        %p261 = scmp.eq.s32.totalorder %s25, 0
        // Predicated region
        $region49: #{tpu_custom_call.1} parent=35 // pred_check
          %p262 = pneg %p261
        $region50: #{tpu_custom_call.1} parent=35 // pred_check_branch
          %264 = sbr.rel (%p262) target = $region52
        $region51: #{tpu_custom_call.1} parent=35 // pred_region
          %265 = vst [vmem:[#allocation2] sm:$0xf] 0.0
        $region52: #{tpu_custom_call.1} parent=35 // pred_fallthru
          _
        %v266 = vld [vmem:[%s229] sm:$0xff]
        %v267 = vld [vmem:[%s229 + $0x8] sm:$0xff]
        %v268 = vpack.c.bf16 %v267, %v266
        %v269 = vld [vmem:[#allocation6] sm:$0xff]
        %v270 = vld [vmem:[#allocation6 + $0x8] sm:$0xff]
        %v271 = vld [vmem:[#allocation6 + $0x10] sm:$0xff]
        %v272 = vld [vmem:[#allocation6 + $0x18] sm:$0xff]
        %v273 = vld [vmem:[#allocation6 + $0x20] sm:$0xff]
        %v274 = vld [vmem:[#allocation6 + $0x28] sm:$0xff]
        %v275 = vld [vmem:[#allocation6 + $0x30] sm:$0xff]
        %v276 = vld [vmem:[#allocation6 + $0x38] sm:$0xff]
        %v277 = vld [vmem:[#allocation6 + $0x40] sm:$0xff]
        %v278 = vld [vmem:[#allocation6 + $0x48] sm:$0xff]
        %v279 = vld [vmem:[#allocation6 + $0x50] sm:$0xff]
        %v280 = vld [vmem:[#allocation6 + $0x58] sm:$0xff]
        %v281 = vld [vmem:[#allocation6 + $0x60] sm:$0xff]
        %v282 = vld [vmem:[#allocation6 + $0x68] sm:$0xff]
        %v283 = vld [vmem:[#allocation6 + $0x70] sm:$0xff]
        %v284 = vld [vmem:[#allocation6 + $0x78] sm:$0xff]
        %v301 = vunpack.c.l.b16 %v269
        %v302 = vunpack.c.h.b16 %v269
        %v303 = vunpack.c.l.b16 %v270
        %v304 = vunpack.c.h.b16 %v270
        %v305 = vunpack.c.l.b16 %v271
        %v306 = vunpack.c.h.b16 %v271
        %v307 = vunpack.c.l.b16 %v272
        %v308 = vunpack.c.h.b16 %v272
        %v309 = vunpack.c.l.b16 %v273
        %v310 = vunpack.c.h.b16 %v273
        %v311 = vunpack.c.l.b16 %v274
        %v312 = vunpack.c.h.b16 %v274
        %v313 = vunpack.c.l.b16 %v275
        %v314 = vunpack.c.h.b16 %v275
        %v315 = vunpack.c.l.b16 %v276
        %v316 = vunpack.c.h.b16 %v276
        %v317 = vunpack.c.l.b16 %v277
        %v318 = vunpack.c.h.b16 %v277
        %v319 = vunpack.c.l.b16 %v278
        %v320 = vunpack.c.h.b16 %v278
        %v321 = vunpack.c.l.b16 %v279
        %v322 = vunpack.c.h.b16 %v279
        %v323 = vunpack.c.l.b16 %v280
        %v324 = vunpack.c.h.b16 %v280
        %v325 = vunpack.c.l.b16 %v281
        %v326 = vunpack.c.h.b16 %v281
        %v327 = vunpack.c.l.b16 %v282
        %v328 = vunpack.c.h.b16 %v282
        %v329 = vunpack.c.l.b16 %v283
        %v330 = vunpack.c.h.b16 %v283
        %v331 = vunpack.c.l.b16 %v284
        %v332 = vunpack.c.h.b16 %v284
        %v333 = vpack.c.b16 %v303, %v301
        %v334 = vpack.c.b16 %v304, %v302
        %v335 = vpack.c.b16 %v307, %v305
        %v336 = vpack.c.b16 %v308, %v306
        %v337 = vpack.c.b16 %v311, %v309
        %v338 = vpack.c.b16 %v312, %v310
        %v339 = vpack.c.b16 %v315, %v313
        %v340 = vpack.c.b16 %v316, %v314
        %v341 = vpack.c.b16 %v319, %v317
        %v342 = vpack.c.b16 %v320, %v318
        %v343 = vpack.c.b16 %v323, %v321
        %v344 = vpack.c.b16 %v324, %v322
        %v345 = vpack.c.b16 %v327, %v325
        %v346 = vpack.c.b16 %v328, %v326
        %v347 = vpack.c.b16 %v331, %v329
        %v348 = vpack.c.b16 %v332, %v330
        %365 = vmatpush.bf16.msra.mxu0 %v347
        %366 = vmatpush.bf16.msra.mxu0 %v345
        %367 = vmatpush.bf16.msra.mxu0 %v343
        %368 = vmatpush.bf16.msra.mxu0 %v341
        %369 = vmatpush.bf16.msra.mxu0 %v339
        %370 = vmatpush.bf16.msra.mxu0 %v337
        %371 = vmatpush.bf16.msra.mxu0 %v335
        %372 = vmatpush.bf16.msra.mxu0 %v333
        %373 = vmatmul.bf16.gmra.mxu0 %v268
        %v374 = vpop.f32.mrf.mxu0
        %v375 = vadd.f32 0.0, %v374
        %v376 = vpop.f32.mrf.mxu0
        %v377 = vadd.f32 0.0, %v376
        %378 = vdwg.mxu0
        %379 = vmatpush.bf16.msra.mxu0 %v348
        %380 = vmatpush.bf16.msra.mxu0 %v346
        %381 = vmatpush.bf16.msra.mxu0 %v344
        %382 = vmatpush.bf16.msra.mxu0 %v342
        %383 = vmatpush.bf16.msra.mxu0 %v340
        %384 = vmatpush.bf16.msra.mxu0 %v338
        %385 = vmatpush.bf16.msra.mxu0 %v336
        %386 = vmatpush.bf16.msra.mxu0 %v334
        %387 = vmatmul.bf16.gmra.mxu0 %v268
        %v388 = vpop.f32.mrf.mxu0
        %v389 = vadd.f32 0.0, %v388
        %v390 = vpop.f32.mrf.mxu0
        %v391 = vadd.f32 0.0, %v390
        %392 = vdwg.mxu0
        %v393 = vld [vmem:[#allocation2] sm:$0xf]
        %v394 = vrot.slane %v375, 4
        %v395 = vadd.f32 %v375, %v394
        %v396 = vrot.slane %v395, 2
        %v397 = vadd.f32 %v395, %v396
        %v398 = vrot.slane %v397, 1
        %v399 = vadd.f32 %v397, %v398
        %v400 = vrot.slane %v389, 4
        %v401 = vadd.f32 %v389, %v400
        %v402 = vrot.slane %v401, 2
        %v403 = vadd.f32 %v401, %v402
        %v404 = vrot.slane %v403, 1
        %v405 = vadd.f32 %v403, %v404
        %v406 = vrot.slane %v377, 4
        %v407 = vadd.f32 %v377, %v406
        %v408 = vrot.slane %v407, 2
        %v409 = vadd.f32 %v407, %v408
        %v410 = vrot.slane %v409, 1
        %v411 = vadd.f32 %v409, %v410
        %v412 = vrot.slane %v391, 4
        %v413 = vadd.f32 %v391, %v412
        %v414 = vrot.slane %v413, 2
        %v415 = vadd.f32 %v413, %v414
        %v416 = vrot.slane %v415, 1
        %v417 = vadd.f32 %v415, %v416
        %v422 = vrot.slane %v405, 6
        %v423 = vrot.slane %v417, 6
        %vm424 = vcmask 1041408
        %v425 = vsel %vm424, %v399, %v422
        %v426 = vsel %vm424, %v411, %v423
        %vm427 = vcmask 1044484
        %v428 = vsel %vm427, %v425, %v425
        %vm429 = vcmask 1046534
        %v430 = vsel %vm429, %v425, %v428
        %v431 = vrot.slane %v426, 7
        %vm432 = vcmask 1041409
        %v433 = vsel %vm432, %v431, %v430
        %vm434 = vcmask 1043459
        %v435 = vsel %vm434, %v431, %v433
        %vm436 = vcmask 1045509
        %v437 = vsel %vm436, %v431, %v435
        %vm438 = vcmask 1047559
        %v439 = vsel %vm438, %v431, %v437
        %v441 = vadd.f32 %v393, %v439
        %442 = vst [vmem:[#allocation2] sm:$0xf] %v441
        %p443 = scmp.eq.s32.totalorder %s25, 1
        // Predicated region
        $region53: #{tpu_custom_call.1} parent=35 // pred_check
          %p444 = pneg %p443
        $region54: #{tpu_custom_call.1} parent=35 // pred_check_branch
          %446 = sbr.rel (%p444) target = $region56
        $region55: #{tpu_custom_call.1} parent=35 // pred_region
          %v447 = vld [vmem:[#allocation2] sm:$0xf]
          %v448 = vld [vmem:[#allocation8] sm:$0xff]
          %v449 = vld [vmem:[#allocation8 + $0x8] sm:$0xff]
          %v450 = vld [vmem:[#allocation8 + $0x10] sm:$0xff]
          %v451 = vld [vmem:[#allocation8 + $0x18] sm:$0xff]
          %v452 = vld [vmem:[#allocation8 + $0x20] sm:$0xff]
          %v453 = vld [vmem:[#allocation8 + $0x28] sm:$0xff]
          %v454 = vld [vmem:[#allocation8 + $0x30] sm:$0xff]
          %v455 = vld [vmem:[#allocation8 + $0x38] sm:$0xff]
          %v456 = vld [vmem:[#allocation8 + $0x40] sm:$0xff]
          %v457 = vld [vmem:[#allocation8 + $0x48] sm:$0xff]
          %v458 = vld [vmem:[#allocation8 + $0x50] sm:$0xff]
          %v459 = vld [vmem:[#allocation8 + $0x58] sm:$0xff]
          %v460 = vld [vmem:[#allocation8 + $0x60] sm:$0xff]
          %v461 = vld [vmem:[#allocation8 + $0x68] sm:$0xff]
          %v462 = vld [vmem:[#allocation8 + $0x70] sm:$0xff]
          %v463 = vld [vmem:[#allocation8 + $0x78] sm:$0xff]
          %v464 = vld [vmem:[#allocation8 + $0x80] sm:$0xff]
          %v465 = vld [vmem:[#allocation8 + $0x88] sm:$0xff]
          %v466 = vld [vmem:[#allocation8 + $0x90] sm:$0xff]
          %v467 = vld [vmem:[#allocation8 + $0x98] sm:$0xff]
          %v468 = vld [vmem:[#allocation8 + $0xa0] sm:$0xff]
          %v469 = vld [vmem:[#allocation8 + $0xa8] sm:$0xff]
          %v470 = vld [vmem:[#allocation8 + $0xb0] sm:$0xff]
          %v471 = vld [vmem:[#allocation8 + $0xb8] sm:$0xff]
          %v472 = vld [vmem:[#allocation8 + $0xc0] sm:$0xff]
          %v473 = vld [vmem:[#allocation8 + $0xc8] sm:$0xff]
          %v474 = vld [vmem:[#allocation8 + $0xd0] sm:$0xff]
          %v475 = vld [vmem:[#allocation8 + $0xd8] sm:$0xff]
          %v476 = vld [vmem:[#allocation8 + $0xe0] sm:$0xff]
          %v477 = vld [vmem:[#allocation8 + $0xe8] sm:$0xff]
          %v478 = vld [vmem:[#allocation8 + $0xf0] sm:$0xff]
          %v479 = vld [vmem:[#allocation8 + $0xf8] sm:$0xff]
          %v480 = vld [vmem:[%s3] sm:$0x1]
          %v482 = vperm.slane %v480, 0
          %485 = vst [vmem:[#allocation1] ss:$4 sm:$0xff] %v447
          %v486 = vld.sshfl [vmem:[#allocation1] sm:$0xff pattern:$0x73625140]
          %v487 = vld.sshfl [vmem:[#allocation1 + $0x8] sm:$0xff pattern:$0x73625140]
          %490 = vmatpush.msra.mxu0 %v463
          %491 = vmatpush.msra.mxu0 %v462
          %492 = vmatpush.msra.mxu0 %v461
          %493 = vmatpush.msra.mxu0 %v460
          %494 = vmatpush.msra.mxu0 %v459
          %495 = vmatpush.msra.mxu0 %v458
          %496 = vmatpush.msra.mxu0 %v457
          %497 = vmatpush.msra.mxu0 %v456
          %498 = vmatpush.msra.mxu0 %v455
          %499 = vmatpush.msra.mxu0 %v454
          %500 = vmatpush.msra.mxu0 %v453
          %501 = vmatpush.msra.mxu0 %v452
          %502 = vmatpush.msra.mxu0 %v451
          %503 = vmatpush.msra.mxu0 %v450
          %504 = vmatpush.msra.mxu0 %v449
          %505 = vmatpush.msra.mxu0 %v448
          %506 = vmatmul.f32.gmra.mxu0 %v486
          %v507 = vpop.f32.mrf.mxu0
          %v508 = vadd.f32 %v482, %v507
          %509 = vdwg.mxu0
          %510 = vmatpush.msra.mxu0 %v479
          %511 = vmatpush.msra.mxu0 %v478
          %512 = vmatpush.msra.mxu0 %v477
          %513 = vmatpush.msra.mxu0 %v476
          %514 = vmatpush.msra.mxu0 %v475
          %515 = vmatpush.msra.mxu0 %v474
          %516 = vmatpush.msra.mxu0 %v473
          %517 = vmatpush.msra.mxu0 %v472
          %518 = vmatpush.msra.mxu0 %v471
          %519 = vmatpush.msra.mxu0 %v470
          %520 = vmatpush.msra.mxu0 %v469
          %521 = vmatpush.msra.mxu0 %v468
          %522 = vmatpush.msra.mxu0 %v467
          %523 = vmatpush.msra.mxu0 %v466
          %524 = vmatpush.msra.mxu0 %v465
          %525 = vmatpush.msra.mxu0 %v464
          %526 = vmatmul.f32.gmra.mxu0 %v487
          %v527 = vpop.f32.mrf.mxu0
          %v528 = vadd.f32 %v508, %v527
          %529 = vdwg.mxu0
          %530 = vst [vmem:[#allocation9] sm:$0x3] %v528
        $region56: #{tpu_custom_call.1} parent=35 // pred_fallthru
          _
        // Predicated region
        $region57: #{tpu_custom_call.1} parent=35 // pred_check
          %p531 = pneg %p141
        $region58: #{tpu_custom_call.1} parent=35 // pred_check_branch
          %533 = sbr.rel (%p531) target = $region60
        $region59: #{tpu_custom_call.1} parent=35 // pred_region
          %535 = vsyncadd [#allocation5], 0
          %s536 = smul.addr %s24, 2
          %s537 = scalar_lea.hbm %s4, %s536
          %s539 = sshll.u32 [#allocation9], 4
          %s540 = int_to_ptr.vmem [resolvable:$true] %s539
          %s541 = sshll.u32 %s537, 4
          %s542 = int_to_ptr.hbm [resolvable:$true] %s541
          %544 = dma.vmem_to_hbm [thread:$0]  %s540, 32, %s542, [#allocation5]
        $region60: #{tpu_custom_call.1} parent=35 // pred_fallthru
          _
        // Predicated region
        $region61: #{tpu_custom_call.1} parent=35 // pred_check
          %p545 = pneg %p141
        $region62: #{tpu_custom_call.1} parent=35 // pred_check_branch
          %547 = sbr.rel (%p545) target = $region64
        $region63: #{tpu_custom_call.1} parent=35 // pred_region
          %549 = dma.done [#allocation5], 32
        $region64: #{tpu_custom_call.1} parent=35 // pred_fallthru
          _
      $region36: #{tpu_custom_call.1} parent=5 // pred_fallthru
        _
      %p550 = scmp.le.s32.totalorder 2, %s15
      // Predicated region
      $region65: #{tpu_custom_call.1} parent=5 // pred_check
        %p551 = pneg %p550
      $region66: #{tpu_custom_call.1} parent=5 // pred_check_branch
        %553 = sbr.rel (%p551) target = $region68
      $region67: #{tpu_custom_call.1} parent=5 // pred_region
        %s554 = ssub.s32 %s15, 2
      $region68: #{tpu_custom_call.1} parent=5 // pred_fallthru
        _
    $region6: #{tpu_custom_call.1} parent=1 // loop_footer
      %s19 = sadd.s32 1, %s15
    $region7: #{tpu_custom_call.1} parent=1 // loop_footer_branch
      %14 = sbr.rel target = $region3
    $region8: #{tpu_custom_call.1} parent=1 // loop_exit
      _
    %555 = vsyncpa [#allocation4], 1
    %s556 = scalar_lea.sflag [#allocation4], 1
    %557 = vsyncpa %s556, 1
    %558 = vsyncpa [#allocation7], 1
    %559 = vsyncpa [#allocation5], 1
    %s560 = scalar_lea.sflag [#allocation5], 1
    %561 = vsyncpa %s560, 1

</llo_original>
